<compile_context>
chip_gen: v7x
topology: tpu7x:2x2x1
jax: 0.10.0
libtpu: 0.0.40
codegen_flags: <defaults>
</compile_context>

<pallas_src>
import functools

import jax
import jax.numpy as jnp
from jax.experimental import pallas as pl
from jax.experimental.pallas import tpu as pltpu

LANES = 128
MAX_TILE_ROWS = 2048   # (2048,128) f32 block = 1 MiB; 2 inputs x 2 buffers = 4 MiB VMEM


def _round_up(x, m):
    return -(-x // m) * m


def _cdiv(a, b):
    return -(-a // b)


def _num_shards_default() -> int:
    """One shard per TensorCore (2 on megacore/v7x, 1 on v5e/v6e).

    Device attributes differ across jaxlib versions, so probe defensively and
    fall back to 2 (an extra shard on a single-TC chip is harmless)."""
    try:
        dev = jax.devices()[0]
        for attr in ("num_cores", "core_count", "num_tensorcores"):
            v = getattr(dev, attr, None)
            if isinstance(v, int) and 1 <= v <= 16:
                return max(1, min(v, 2))
    except Exception:
        pass
    return 2


def _kl_kernel(mu_ref, lv_ref, out_ref, *, rows, tile_rows, tiles_per_shard):
    p = pl.program_id(0)   # shard axis ("parallel")
    t = pl.program_id(1)   # tile-within-shard axis ("arbitrary" / reduction)

    # Output block index depends only on p -> the (8,128) block stays resident
    # in VMEM across the whole t loop and acts as the accumulator.
    @pl.when(t == 0)
    def _():
        out_ref[...] = jnp.zeros_like(out_ref)

    # NOTE: use the UNCLAMPED block index here. The index_map clamps only the
    # DMA source (so overhang steps re-read the last valid tile); the
    # rows_left guard below must see the true index so overhang steps are
    # skipped and never double-counted.
    block = p * tiles_per_shard + t
    rows_left = rows - block * tile_rows   # valid rows in this block

    @pl.when(rows_left > 0)                # skip compute on overhang steps
    def _():
        mu = mu_ref[...].astype(jnp.float32)
        lv = lv_ref[...].astype(jnp.float32)
        term = 1.0 + lv - mu * mu - jnp.exp(lv)

        @pl.when(rows_left >= tile_rows)   # steady state: no mask at all
        def _():
            out_ref[...] += jnp.sum(term.reshape(-1, 8, LANES), axis=0)

        @pl.when(rows_left < tile_rows)    # only the single partial last tile
        def _():
            rid = jax.lax.broadcasted_iota(jnp.int32, (tile_rows, LANES), 0)
            masked = jnp.where(rid < rows_left, term, 0.0)
            out_ref[...] += jnp.sum(masked.reshape(-1, 8, LANES), axis=0)


def kl_divergence_standard_normal(mu: jax.Array, log_var: jax.Array) -> jax.Array:
    assert mu.shape == log_var.shape, "mu and log_var must have the same shape"
    n = int(mu.size)
    if n == 0:
        return jnp.float32(float("nan"))  # matches torch.mean over an empty tensor

    mu_flat = mu.reshape(-1)
    lv_flat = log_var.reshape(-1)

    rows = n // LANES          # lane-aligned prefix handled by the kernel
    n_main = rows * LANES
    tail = n - n_main          # < 128 leftover elements handled in plain JAX

    total = jnp.float32(0.0)

    if rows > 0:
        if tail:
            mu2 = mu_flat[:n_main].reshape(rows, LANES)
            lv2 = lv_flat[:n_main].reshape(rows, LANES)
        else:
            mu2 = mu_flat.reshape(rows, LANES)   # free reshape, no copy
            lv2 = lv_flat.reshape(rows, LANES)

        itemsize = jnp.dtype(mu.dtype).itemsize
        sub_mult = max(8, 32 // max(itemsize, 1))   # 8 f32, 16 bf16, 32 int8/fp8
        tile_rows = min(MAX_TILE_ROWS, _round_up(rows, sub_mult))
        total_tiles = _cdiv(rows, tile_rows)
        num_shards = max(1, min(_num_shards_default(), total_tiles))
        tiles_per_shard = _cdiv(total_tiles, num_shards)

        def in_map(p, t):
            # Clamp so the DMA never indexes past the array on overhang steps;
            # the in-kernel rows_left guard (computed from the UNCLAMPED block
            # index) skips those steps entirely, so there is no double count.
            return (jnp.minimum(p * tiles_per_shard + t, total_tiles - 1), 0)

        kernel = functools.partial(
            _kl_kernel,
            rows=rows,
            tile_rows=tile_rows,
            tiles_per_shard=tiles_per_shard,
        )

        cost = pl.CostEstimate(
            flops=6 * n_main,
            transcendentals=n_main,
            bytes_accessed=2 * n_main * itemsize + num_shards * 8 * LANES * 4,
        )

        partials = pl.pallas_call(
            kernel,
            out_shape=jax.ShapeDtypeStruct((num_shards * 8, LANES), jnp.float32),
            grid_spec=pltpu.PrefetchScalarGridSpec(
                num_scalar_prefetch=0,
                grid=(num_shards, tiles_per_shard),
                in_specs=[
                    pl.BlockSpec((tile_rows, LANES), in_map),
                    pl.BlockSpec((tile_rows, LANES), in_map),
                ],
                out_specs=pl.BlockSpec((8, LANES), lambda p, t: (p, 0)),
            ),
            compiler_params=pltpu.CompilerParams(
                dimension_semantics=("parallel", "arbitrary"),
            ),
            cost_estimate=cost,
        )(mu2, lv2)

        total = total + jnp.sum(partials)

    if tail:
        mu_t = mu_flat[n_main:].astype(jnp.float32)
        lv_t = lv_flat[n_main:].astype(jnp.float32)
        total = total + jnp.sum(1.0 + lv_t - mu_t * mu_t - jnp.exp(lv_t))

    return total * jnp.float32(-0.5 / n)


if __name__ == "__main__":
    key = jax.random.PRNGKey(0)
    k1, k2, k3, k4, k5, k6, k7, k8 = jax.random.split(key, 8)

    def ref_kl(mu, lv):
        mu = mu.astype(jnp.float32)
        lv = lv.astype(jnp.float32)
        return -0.5 * jnp.mean(1.0 + lv - mu**2 - jnp.exp(lv))

    # 1) Typical VAE latent, NCHW, f32, lane-aligned -> single full tile.
    mu = jax.random.normal(k1, (2, 4, 16, 16), dtype=jnp.float32)
    log_var = 0.1 * jax.random.normal(k2, (2, 4, 16, 16), dtype=jnp.float32)
    kl = kl_divergence_standard_normal(mu, log_var)
    jax.block_until_ready(kl)
    assert jnp.allclose(kl, ref_kl(mu, log_var), rtol=1e-5, atol=1e-6), (kl, ref_kl(mu, log_var))

    # 2) Odd size (not a multiple of 128) -> exercises masked partial tile +
    #    the plain-JAX <128-element tail path (no full-tensor pad).
    mu_o = jax.random.normal(k3, (3, 5, 7, 9), dtype=jnp.float32)
    lv_o = 0.2 * jax.random.normal(k4, (3, 5, 7, 9), dtype=jnp.float32)
    kl_o = kl_divergence_standard_normal(mu_o, lv_o)
    assert jnp.allclose(kl_o, ref_kl(mu_o, lv_o), rtol=1e-5, atol=1e-6), (kl_o, ref_kl(mu_o, lv_o))

    # 3) Larger bf16 input -> multi-tile, multi-shard path, bf16 sublane
    #    packing (tile_rows % 16 == 0), unmasked steady state + masked last tile.
    mu_b = jax.random.normal(k5, (4, 6, 128, 128), dtype=jnp.bfloat16)
    lv_b = (0.1 * jax.random.normal(k6, (4, 6, 128, 128), jnp.float32)).astype(jnp.bfloat16)
    kl_b = kl_divergence_standard_normal(mu_b, lv_b)
    assert jnp.allclose(kl_b, ref_kl(mu_b, lv_b), rtol=1e-3, atol=1e-5), (kl_b, ref_kl(mu_b, lv_b))

    # 4) Tiny input (< 128 elements) -> pure tail path, kernel skipped.
    mu_t = jax.random.normal(k7, (3, 7), dtype=jnp.float32)
    lv_t = 0.3 * jax.random.normal(k8, (3, 7), dtype=jnp.float32)
    kl_t = kl_divergence_standard_normal(mu_t, lv_t)
    assert jnp.allclose(kl_t, ref_kl(mu_t, lv_t), rtol=1e-5, atol=1e-6), (kl_t, ref_kl(mu_t, lv_t))

    jax.block_until_ready((kl, kl_o, kl_b, kl_t))
    print("KERNEL_OK")
</pallas_src>

<mosaic_0001>
module attributes {stable_mosaic.version = 11 : i64} {
  func.func @_kl_kernel(%arg0: i32, %arg1: i32, %arg2: memref<16x128xf32, #tpu.memory_space<vmem>>, %arg3: memref<16x128xf32, #tpu.memory_space<vmem>>, %arg4: memref<8x128xf32, #tpu.memory_space<vmem>>) attributes {dimension_semantics = [#tpu.dimension_semantics<parallel>, #tpu.dimension_semantics<arbitrary>], iteration_bounds = array<i64: 1, 1>, scalar_prefetch = 0 : i64, scratch_operands = 0 : i64, tpu.core_type = #tpu.core_type<tc>, window_params = [{transform_indices = @transform_0, window_bounds = array<i64: 16, 128>}, {transform_indices = @transform_1, window_bounds = array<i64: 16, 128>}, {transform_indices = @transform_2, window_bounds = array<i64: 8, 128>}]} {
    %c0_i32 = arith.constant 0 : i32
    %0 = arith.cmpi eq, %arg1, %c0_i32 : i32
    %1 = arith.extui %0 : i1 to i32
    %c0_i32_0 = arith.constant 0 : i32
    %2 = arith.cmpi ne, %1, %c0_i32_0 : i32
    scf.if %2 {
      %cst = arith.constant 0.000000e+00 : f32
      %10 = vector.broadcast %cst : f32 to vector<8x128xf32>
      %c0 = arith.constant 0 : index
      %c0_4 = arith.constant 0 : index
      %11 = vector.load %arg4[%c0, %c0_4] : memref<8x128xf32, #tpu.memory_space<vmem>>, vector<8x128xf32>
      tpu.vector_store %arg4[%c0, %c0_4], %10 {strides = array<i32>} : memref<8x128xf32, #tpu.memory_space<vmem>>, vector<8x128xf32>,
    } else {
    }
    %c1_i32 = arith.constant 1 : i32
    %3 = arith.muli %arg0, %c1_i32 : i32
    %4 = arith.addi %3, %arg1 : i32
    %c16_i32 = arith.constant 16 : i32
    %5 = arith.muli %4, %c16_i32 : i32
    %c16_i32_1 = arith.constant 16 : i32
    %6 = arith.subi %c16_i32_1, %5 : i32
    %c0_i32_2 = arith.constant 0 : i32
    %7 = arith.cmpi sgt, %6, %c0_i32_2 : i32
    %8 = arith.extui %7 : i1 to i32
    %c0_i32_3 = arith.constant 0 : i32
    %9 = arith.cmpi ne, %8, %c0_i32_3 : i32
    scf.if %9 {
      %c0 = arith.constant 0 : index
      %c0_4 = arith.constant 0 : index
      %10 = vector.load %arg2[%c0, %c0_4] : memref<16x128xf32, #tpu.memory_space<vmem>>, vector<16x128xf32>
      %c0_5 = arith.constant 0 : index
      %c0_6 = arith.constant 0 : index
      %11 = vector.load %arg3[%c0_5, %c0_6] : memref<16x128xf32, #tpu.memory_space<vmem>>, vector<16x128xf32>
      %cst = arith.constant 1.000000e+00 : f32
      %12 = vector.broadcast %cst : f32 to vector<16x128xf32>
      %13 = arith.addf %12, %11 : vector<16x128xf32>
      %14 = arith.mulf %10, %10 : vector<16x128xf32>
      %15 = arith.subf %13, %14 : vector<16x128xf32>
      %16 = math.exp %11 : vector<16x128xf32>
      %17 = arith.subf %15, %16 : vector<16x128xf32>
      %c16_i32_7 = arith.constant 16 : i32
      %18 = arith.cmpi sge, %6, %c16_i32_7 : i32
      %19 = arith.extui %18 : i1 to i32
      %c0_i32_8 = arith.constant 0 : i32
      %20 = arith.cmpi ne, %19, %c0_i32_8 : i32
      scf.if %20 {
        %c0_11 = arith.constant 0 : index
        %c0_12 = arith.constant 0 : index
        %24 = vector.load %arg4[%c0_11, %c0_12] : memref<8x128xf32, #tpu.memory_space<vmem>>, vector<8x128xf32>
        %25 = vector.shape_cast %17 : vector<16x128xf32> to vector<2x8x128xf32>
        %cst_13 = arith.constant dense<0.000000e+00> : vector<8x128xf32>
        %26 = vector.multi_reduction <add>, %25, %cst_13 [0] : vector<2x8x128xf32> to vector<8x128xf32>
        %27 = arith.addf %24, %26 : vector<8x128xf32>
        %c0_14 = arith.constant 0 : index
        %c0_15 = arith.constant 0 : index
        %28 = vector.load %arg4[%c0_14, %c0_15] : memref<8x128xf32, #tpu.memory_space<vmem>>, vector<8x128xf32>
        tpu.vector_store %arg4[%c0_14, %c0_15], %27 {strides = array<i32>} : memref<8x128xf32, #tpu.memory_space<vmem>>, vector<8x128xf32>,
      } else {
      }
      %c16_i32_9 = arith.constant 16 : i32
      %21 = arith.cmpi slt, %6, %c16_i32_9 : i32
      %22 = arith.extui %21 : i1 to i32
      %c0_i32_10 = arith.constant 0 : i32
      %23 = arith.cmpi ne, %22, %c0_i32_10 : i32
      scf.if %23 {
        %24 = tpu.iota {dimensions = array<i32: 0>} : vector<16x128xi32>
        %25 = vector.broadcast %6 : i32 to vector<16x128xi32>
        %26 = arith.cmpi slt, %24, %25 : vector<16x128xi32>
        %cst_11 = arith.constant 0.000000e+00 : f32
        %27 = vector.broadcast %cst_11 : f32 to vector<16x128xf32>
        %28 = arith.select %26, %17, %27 : vector<16x128xi1>, vector<16x128xf32>
        %c0_12 = arith.constant 0 : index
        %c0_13 = arith.constant 0 : index
        %29 = vector.load %arg4[%c0_12, %c0_13] : memref<8x128xf32, #tpu.memory_space<vmem>>, vector<8x128xf32>
        %30 = vector.shape_cast %28 : vector<16x128xf32> to vector<2x8x128xf32>
        %cst_14 = arith.constant dense<0.000000e+00> : vector<8x128xf32>
        %31 = vector.multi_reduction <add>, %30, %cst_14 [0] : vector<2x8x128xf32> to vector<8x128xf32>
        %32 = arith.addf %29, %31 : vector<8x128xf32>
        %c0_15 = arith.constant 0 : index
        %c0_16 = arith.constant 0 : index
        %33 = vector.load %arg4[%c0_15, %c0_16] : memref<8x128xf32, #tpu.memory_space<vmem>>, vector<8x128xf32>
        tpu.vector_store %arg4[%c0_15, %c0_16], %32 {strides = array<i32>} : memref<8x128xf32, #tpu.memory_space<vmem>>, vector<8x128xf32>,
      } else {
      }
    } else {
    }
    return
  }
  func.func @transform_0(%arg0: i32, %arg1: i32) -> (i32, i32) {
    %c1_i32 = arith.constant 1 : i32
    %0 = arith.muli %arg0, %c1_i32 : i32
    %1 = arith.addi %0, %arg1 : i32
    %c0_i32 = arith.constant 0 : i32
    %2 = arith.minsi %1, %c0_i32 : i32
    %c0_i32_0 = arith.constant 0 : i32
    %c0_i32_1 = arith.constant 0 : i32
    return %2, %c0_i32_0 : i32, i32
  }
  func.func @transform_1(%arg0: i32, %arg1: i32) -> (i32, i32) {
    %c1_i32 = arith.constant 1 : i32
    %0 = arith.muli %arg0, %c1_i32 : i32
    %1 = arith.addi %0, %arg1 : i32
    %c0_i32 = arith.constant 0 : i32
    %2 = arith.minsi %1, %c0_i32 : i32
    %c0_i32_0 = arith.constant 0 : i32
    %c0_i32_1 = arith.constant 0 : i32
    return %2, %c0_i32_0 : i32, i32
  }
  func.func @transform_2(%arg0: i32, %arg1: i32) -> (i32, i32) {
    %c0_i32 = arith.constant 0 : i32
    %c0_i32_0 = arith.constant 0 : i32
    return %arg0, %c0_i32 : i32, i32
  }
}

</mosaic_0001>

<llo_original>
// kernel: tpu_custom_call.1
$region0: #{tpu_custom_call.1}
  #allocation0 [shape = 'u32[]', space=smem, size = 0x4, offset = 0x4, fixed_abs, tag = 'smem constant byte address 0x4 - core index']
  #allocation1 [shape = 'u32[144,128]{1,0:T(1,128)}', space=vmem, size = 0x12000, scoped, tag = 'internal scratch']
  %s0 = inlined_call_operand.hbm [shape: f32[16,128], index: 0, kind: input, shape index: {}]
  %s1 = inlined_call_operand.hbm [shape: f32[16,128], index: 1, kind: input, shape index: {}]
  %s2 = inlined_call_operand.hbm [shape: f32[8,128], index: 2, kind: output, shape index: {}]
  %s3 = sld [smem:[#allocation0]]
  $region42: #{tpu_custom_call.1} parent=0
    _
  %s5 = ssub.s32 1, %s3
  %s6 = scalar_select 0, %s5, %s3
  $region1: #{tpu_custom_call.1} parent=0
    #allocation2 [shape = 'u8[8192]{0}', space=vmem, size = 0x2000, scoped, tag = 'input window, operand 0, single buffered']
    #allocation3 [shape = 's32[1]{0}', space=sflag, size = 0x4, scoped, tag = 'scoped memory for tpu_custom_call.1']
    #allocation4 [shape = 's32[1]{0}', space=sflag, size = 0x4, scoped, tag = 'scoped memory for tpu_custom_call.1']
    #allocation5 [shape = 'u8[8192]{0}', space=vmem, size = 0x2000, scoped, tag = 'input window, operand 1, single buffered']
    #allocation6 [shape = 's32[1]{0}', space=sflag, size = 0x4, scoped, tag = 'scoped memory for tpu_custom_call.1']
    #allocation7 [shape = 'u8[4096]{0}', space=vmem, size = 0x1000, scoped, tag = 'output window, operand 0, single buffered']
    %7 = vsyncpa [#allocation3], 0
    %8 = vsyncpa [#allocation6], 0
    %9 = vsyncpa [#allocation4], 0
    // Predicated region
    $region2: #{tpu_custom_call.1} parent=1 // pred_check
      _
    $region3: #{tpu_custom_call.1} parent=1 // pred_check_branch
      %11 = sbr.rel (0) target = $region5
    $region4: #{tpu_custom_call.1} parent=1 // pred_region
      %s12 = sadd.s32 0, 0
      %p13 = scmp.lt.s32.totalorder %s12, 0
      %s14 = scalar_select %p13, %s12, 0
      %s15 = smul.u32 2, %s14
      %s17 = ssub.s32 256, 256
      %18 = vsyncadd [#allocation3], %s17
      %s19 = smul.addr %s15, 128
      %s20 = scalar_lea.hbm %s0, %s19
      %s21 = sshll.u32 [#allocation2], 4
      %s22 = int_to_ptr.vmem [resolvable:$true] %s21
      %27 = dma.hbm_to_vmem [thread:$0]  %s20, 256, %s22, [#allocation3], 128, 128, 8
    $region5: #{tpu_custom_call.1} parent=1 // pred_fallthru
      _
    // Predicated region
    $region6: #{tpu_custom_call.1} parent=1 // pred_check
      _
    $region7: #{tpu_custom_call.1} parent=1 // pred_check_branch
      %29 = sbr.rel (0) target = $region9
    $region8: #{tpu_custom_call.1} parent=1 // pred_region
      %s30 = sadd.s32 0, 0
      %p31 = scmp.lt.s32.totalorder %s30, 0
      %s32 = scalar_select %p31, %s30, 0
      %s33 = smul.u32 2, %s32
      %s35 = ssub.s32 256, 256
      %36 = vsyncadd [#allocation6], %s35
      %s37 = smul.addr %s33, 128
      %s38 = scalar_lea.hbm %s1, %s37
      %s39 = sshll.u32 [#allocation5], 4
      %s40 = int_to_ptr.vmem [resolvable:$true] %s39
      %45 = dma.hbm_to_vmem [thread:$0]  %s38, 256, %s40, [#allocation6], 128, 128, 8
    $region9: #{tpu_custom_call.1} parent=1 // pred_fallthru
      _
    // Predicated region
    $region10: #{tpu_custom_call.1} parent=1 // pred_check
      _
    $region11: #{tpu_custom_call.1} parent=1 // pred_check_branch
      %47 = sbr.rel (0) target = $region13
    $region12: #{tpu_custom_call.1} parent=1 // pred_region
      %48 = dma.done [#allocation3], 256
    $region13: #{tpu_custom_call.1} parent=1 // pred_fallthru
      _
    // Predicated region
    $region14: #{tpu_custom_call.1} parent=1 // pred_check
      _
    $region15: #{tpu_custom_call.1} parent=1 // pred_check_branch
      %50 = sbr.rel (0) target = $region17
    $region16: #{tpu_custom_call.1} parent=1 // pred_region
      %51 = dma.done [#allocation6], 256
    $region17: #{tpu_custom_call.1} parent=1 // pred_fallthru
      _
    %s52 = sadd.s32 0, 0
    %p53 = scmp.lt.s32.totalorder %s52, 0
    %s54 = scalar_select %p53, %s52, 0
    %s55 = smul.u32 2, %s54
    %s56 = sadd.s32 0, 0
    %p57 = scmp.lt.s32.totalorder %s56, 0
    %s58 = scalar_select %p57, %s56, 0
    %s59 = smul.u32 2, %s58
    %p60 = scmp.eq.s32.totalorder 0, 0
    // Predicated region
    $region18: #{tpu_custom_call.1} parent=1 // pred_check
      %p61 = pneg %p60
    $region19: #{tpu_custom_call.1} parent=1 // pred_check_branch
      %63 = sbr.rel (%p61) target = $region21
    $region20: #{tpu_custom_call.1} parent=1 // pred_region
      %64 = vst [vmem:[#allocation7] sm:$0xff] 0.0
    $region21: #{tpu_custom_call.1} parent=1 // pred_fallthru
      _
    %s65 = sadd.s32 0, 0
    %s66 = smul.u32 %s65, 16
    %s67 = ssub.s32 16, %s66
    %p68 = scmp.gt.s32.totalorder %s67, 0
    // Predicated region
    $region22: #{tpu_custom_call.1} parent=1 // pred_check
      %p69 = pneg %p68
    $region23: #{tpu_custom_call.1} parent=1 // pred_check_branch
      %71 = sbr.rel (%p69) target = $region25
    $region24: #{tpu_custom_call.1} parent=1 // pred_region
      %v72 = vld [vmem:[#allocation2] sm:$0xff]
      %v73 = vld [vmem:[#allocation2 + $0x8] sm:$0xff]
      %v74 = vld [vmem:[#allocation5] sm:$0xff]
      %v75 = vld [vmem:[#allocation5 + $0x8] sm:$0xff]
      %v76 = vadd.f32 %v74, 1.0
      %v77 = vadd.f32 %v75, 1.0
      %v78 = vmul.f32 %v72, %v72
      %v79 = vmul.f32 %v73, %v73
      %v80 = vsub.f32 %v76, %v78
      %v81 = vsub.f32 %v77, %v79
      %v82 = vmul.f32 %v74, 1.442695
      %v83 = vpow.pop %v82
      %v84 = vmul.f32 %v75, 1.442695
      %v85 = vpow.pop %v84
      %v86 = vsub.f32 %v80, %v83
      %v87 = vsub.f32 %v81, %v85
      %p88 = scmp.ge.s32.totalorder %s67, 16
      // Predicated region
      $region26: #{tpu_custom_call.1} parent=24 // pred_check
        %p89 = pneg %p88
      $region27: #{tpu_custom_call.1} parent=24 // pred_check_branch
        %91 = sbr.rel (%p89) target = $region29
      $region28: #{tpu_custom_call.1} parent=24 // pred_region
        %v92 = vld [vmem:[#allocation7] sm:$0xff]
        %v93 = vadd.f32 %v86, %v87
        %v94 = vadd.f32 %v92, %v93
        %95 = vst [vmem:[#allocation7] sm:$0xff] %v94
      $region29: #{tpu_custom_call.1} parent=24 // pred_fallthru
        _
      %p96 = scmp.lt.s32.totalorder %s67, 16
      // Predicated region
      $region30: #{tpu_custom_call.1} parent=24 // pred_check
        %p97 = pneg %p96
      $region31: #{tpu_custom_call.1} parent=24 // pred_check_branch
        %99 = sbr.rel (%p97) target = $region33
      $region32: #{tpu_custom_call.1} parent=24 // pred_region
        %v100 = vlaneseq
        %v101 = vshrl.u32 %v100, 7
        %v102 = vadd.s32 %v101, 8
        %v103 = vstv %s67
        %vm104 = vcmp.lt.s32.totalorder %v101, %v103
        %vm105 = vcmp.lt.s32.totalorder %v102, %v103
        %v106 = vsel %vm104, %v86, 0.0
        %v107 = vsel %vm105, %v87, 0.0
        %v108 = vld [vmem:[#allocation7] sm:$0xff]
        %v109 = vadd.f32 %v106, %v107
        %v110 = vadd.f32 %v108, %v109
        %111 = vst [vmem:[#allocation7] sm:$0xff] %v110
      $region33: #{tpu_custom_call.1} parent=24 // pred_fallthru
        _
    $region25: #{tpu_custom_call.1} parent=1 // pred_fallthru
      _
    // Predicated region
    $region34: #{tpu_custom_call.1} parent=1 // pred_check
      _
    $region35: #{tpu_custom_call.1} parent=1 // pred_check_branch
      %113 = sbr.rel (0) target = $region37
    $region36: #{tpu_custom_call.1} parent=1 // pred_region
      %s115 = ssub.s32 128, 128
      %116 = vsyncadd [#allocation4], %s115
      %s118 = sshll.u32 [#allocation7], 4
      %s119 = int_to_ptr.vmem [resolvable:$true] %s118
      %121 = dma.vmem_to_hbm [thread:$0]  %s119, 128, %s2, [#allocation4]
    $region37: #{tpu_custom_call.1} parent=1 // pred_fallthru
      _
    // Predicated region
    $region38: #{tpu_custom_call.1} parent=1 // pred_check
      _
    $region39: #{tpu_custom_call.1} parent=1 // pred_check_branch
      %123 = sbr.rel (0) target = $region41
    $region40: #{tpu_custom_call.1} parent=1 // pred_region
      %124 = dma.done [#allocation4], 128
    $region41: #{tpu_custom_call.1} parent=1 // pred_fallthru
      _
    %125 = vsyncpa [#allocation3], 1
    %126 = vsyncpa [#allocation6], 1
    %127 = vsyncpa [#allocation4], 1

</llo_original>
